<compile_context>
chip_gen: v7x
topology: tpu7x:2x2x1
jax: 0.10.0
libtpu: 0.0.40
codegen_flags: <defaults>
</compile_context>

<pallas_src>
import functools
import math

import jax
import jax.numpy as jnp
from jax.experimental import pallas as pl
from jax.experimental.pallas import tpu as pltpu


def _round_up(v, m):
    return ((v + m - 1) // m) * m


def _layer_norm_kernel(x_ref, g_ref, b_ref, o_ref, *, eps):
    # x_ref: (tm, D)   g_ref, b_ref: (1, D)   o_ref: (tm, D)
    x = x_ref[...].astype(jnp.float32)                       # (tm, D) f32 working copy
    mean = jnp.mean(x, axis=-1, keepdims=True)                # (tm, 1)
    xc = x - mean                                             # centered (exactly as torch)
    var = jnp.mean(xc * xc, axis=-1, keepdims=True)           # (tm, 1), biased variance
    inv = jax.lax.rsqrt(var + eps)                            # (tm, 1)

    gamma = g_ref[...].astype(jnp.float32)                    # (1, D)
    beta = b_ref[...].astype(jnp.float32)                     # (1, D)
    # Broadcast normalize: no (tm, D) scale/shift temporaries are materialized.
    o_ref[...] = ((xc * inv) * gamma + beta).astype(o_ref.dtype)


def _vmem_limit_bytes():
    """~75% of physical VMEM, capped at 96 MiB (v5e/v6e: 128 MiB, v7x: 64 MiB/TC)."""
    try:
        cap = int(pltpu.get_tpu_info().vmem_capacity_bytes)
    except Exception:
        cap = 64 * 1024 * 1024  # conservative (v7x-sized) fallback
    return max(32 * 1024 * 1024, min(cap * 3 // 4, 96 * 1024 * 1024))


def _choose_tm(N, D, itemsize, vmem_limit):
    """Adaptive row tile: ~4 MiB input blocks, bounded by VMEM budget and row count."""
    target_block_bytes = 4 * 1024 * 1024
    tm = (target_block_bytes // max(D * itemsize, 1)) // 16 * 16
    tm = max(256, min(tm, 1024))

    # VMEM budget: double-buffered in+out blocks (4 * itemsize bytes/elem) plus
    # ~3 f32 full-tile temporaries (12 bytes/elem) must stay under ~60% of the limit.
    per_row_bytes = D * (4 * itemsize + 12)
    vmem_cap_rows = (int(vmem_limit * 0.6) // per_row_bytes) // 16 * 16
    tm = min(tm, max(16, vmem_cap_rows))

    # Keep >= 2 grid blocks for large N so a v7x megacore can shard the row axis.
    if N >= 512 and tm >= N:
        tm = _round_up(-(-N // 2), 16)

    # Never exceed the (sublane-rounded) row count.
    tm = min(tm, max(16, _round_up(N, 16)))
    return max(8, tm)


def layer_norm(x, weight=None, bias=None, *, eps=1e-5, tm=None):
    """F.layer_norm(x, (D,), weight, bias, eps) over the last dimension."""
    orig_shape = x.shape
    D = int(orig_shape[-1])
    N = int(math.prod(orig_shape[:-1])) if len(orig_shape) > 1 else 1
    x2 = x.reshape(N, D)

    if weight is None:
        weight = jnp.ones((D,), dtype=x.dtype)
    if bias is None:
        bias = jnp.zeros((D,), dtype=x.dtype)
    g = weight.reshape(1, D)
    b = bias.reshape(1, D)

    itemsize = jnp.dtype(x.dtype).itemsize
    vmem_limit = _vmem_limit_bytes()
    if tm is None:
        tm = _choose_tm(N, D, itemsize, vmem_limit)
    else:
        tm = max(8, _round_up(int(tm), 8))
        tm = min(tm, max(8, _round_up(N, 8)))

    grid = pl.cdiv(N, tm)  # partial last block handled by Pallas (masked stores)

    cost = pl.CostEstimate(
        flops=int(8 * N * D),
        transcendentals=int(N),
        bytes_accessed=int(2 * N * D * itemsize + 2 * D * jnp.dtype(weight.dtype).itemsize),
    )

    kernel = functools.partial(_layer_norm_kernel, eps=float(eps))
    out = pl.pallas_call(
        kernel,
        out_shape=jax.ShapeDtypeStruct((N, D), x.dtype),
        grid_spec=pltpu.PrefetchScalarGridSpec(
            num_scalar_prefetch=0,
            grid=(grid,),
            in_specs=[
                pl.BlockSpec((tm, D), lambda i: (i, 0)),   # x rows (lane-dense, full D)
                pl.BlockSpec((1, D), lambda i: (0, 0)),    # gamma (resident)
                pl.BlockSpec((1, D), lambda i: (0, 0)),    # beta  (resident)
            ],
            out_specs=pl.BlockSpec((tm, D), lambda i: (i, 0)),
        ),
        compiler_params=pltpu.CompilerParams(
            dimension_semantics=("parallel",),
            vmem_limit_bytes=int(vmem_limit),
        ),
        cost_estimate=cost,
    )(x2, g, b)

    return out.reshape(orig_shape)


def layer_norm_forward(inp, weight, bias, *, eps=1e-5):
    """Mirrors LayerNorm.forward: a (input, embedding) tuple passes embedding through."""
    if isinstance(inp, tuple):
        x, embedding = inp
        return layer_norm(x, weight, bias, eps=eps), embedding
    return layer_norm(inp, weight, bias, eps=eps)


def _reference(x, gamma, beta, eps):
    mean = jnp.mean(x, axis=-1, keepdims=True)
    var = jnp.mean((x - mean) ** 2, axis=-1, keepdims=True)
    return (x - mean) * jax.lax.rsqrt(var + eps) * gamma + beta


if __name__ == "__main__":
    eps = 1e-5
    key = jax.random.PRNGKey(0)
    k1, k2, k3, k4, k5, k6 = jax.random.split(key, 6)

    # Case 1: lane-dense D, tuple path (LayerNorm on input, embedding passes through).
    B, T, D = 2, 8, 256
    x = jax.random.normal(k1, (B, T, D), dtype=jnp.float32)
    embedding = jax.random.normal(k2, (B, T, D), dtype=jnp.float32)
    gamma = 1.0 + 0.1 * jax.random.normal(k3, (D,), dtype=jnp.float32)
    beta = 0.1 * jax.random.normal(k4, (D,), dtype=jnp.float32)

    out_t, emb_out = layer_norm_forward((x, embedding), gamma, beta, eps=eps)
    out_t = jax.block_until_ready(out_t)
    ref = _reference(x, gamma, beta, eps)
    assert out_t.shape == (B, T, D)
    assert jnp.allclose(out_t, ref, atol=1e-5, rtol=1e-5), "tuple-path mismatch"
    assert jnp.array_equal(emb_out, embedding), "embedding must pass through unchanged"

    # Case 2: row count not a multiple of the tile -> partial (masked) last block.
    x2 = jax.random.normal(k5, (5, 8, D), dtype=jnp.float32)   # N = 40 rows, tm = 16 -> 3 blocks
    out2 = jax.block_until_ready(layer_norm(x2, gamma, beta, eps=eps, tm=16))
    ref2 = _reference(x2, gamma, beta, eps)
    assert jnp.allclose(out2, ref2, atol=1e-5, rtol=1e-5), "partial-block mismatch"

    # Case 3: small-D (lane-sparse) path, no affine params (weight=1, bias=0 defaults).
    Ds = 32
    x3 = jax.random.normal(k6, (2, 8, Ds), dtype=jnp.float32)
    out3 = jax.block_until_ready(layer_norm(x3, None, None, eps=eps))
    ref3 = _reference(x3, jnp.ones((Ds,), jnp.float32), jnp.zeros((Ds,), jnp.float32), eps)
    assert jnp.allclose(out3, ref3, atol=1e-5, rtol=1e-5), "small-D mismatch"

    print("KERNEL_OK")
</pallas_src>

<mosaic_0001>
module attributes {stable_mosaic.version = 11 : i64} {
  func.func @_layer_norm_kernel(%arg0: i32, %arg1: memref<16x256xf32, #tpu.memory_space<vmem>>, %arg2: memref<1x256xf32, #tpu.memory_space<vmem>>, %arg3: memref<1x256xf32, #tpu.memory_space<vmem>>, %arg4: memref<16x256xf32, #tpu.memory_space<vmem>>) attributes {dimension_semantics = [#tpu.dimension_semantics<parallel>], iteration_bounds = array<i64: 1>, scalar_prefetch = 0 : i64, scratch_operands = 0 : i64, tpu.core_type = #tpu.core_type<tc>, window_params = [{transform_indices = @transform_0, window_bounds = array<i64: 16, 256>}, {pipeline_mode = #tpu.pipeline_mode<synchronous>, transform_indices = @transform_1, window_bounds = array<i64: 1, 256>}, {pipeline_mode = #tpu.pipeline_mode<synchronous>, transform_indices = @transform_2, window_bounds = array<i64: 1, 256>}, {transform_indices = @transform_3, window_bounds = array<i64: 16, 256>}]} {
    %c0 = arith.constant 0 : index
    %c0_0 = arith.constant 0 : index
    %0 = vector.load %arg1[%c0, %c0_0] : memref<16x256xf32, #tpu.memory_space<vmem>>, vector<16x256xf32>
    %cst = arith.constant dense<0.000000e+00> : vector<16xf32>
    %1 = vector.multi_reduction <add>, %0, %cst [1] : vector<16x256xf32> to vector<16xf32>
    %2 = vector.shape_cast %1 : vector<16xf32> to vector<16x1xf32>
    %cst_1 = arith.constant 2.560000e+02 : f32
    %3 = vector.broadcast %cst_1 : f32 to vector<16x1xf32>
    %4 = arith.divf %2, %3 : vector<16x1xf32>
    %5 = vector.broadcast %4 : vector<16x1xf32> to vector<16x256xf32>
    %6 = arith.subf %0, %5 : vector<16x256xf32>
    %7 = arith.mulf %6, %6 : vector<16x256xf32>
    %cst_2 = arith.constant dense<0.000000e+00> : vector<16xf32>
    %8 = vector.multi_reduction <add>, %7, %cst_2 [1] : vector<16x256xf32> to vector<16xf32>
    %9 = vector.shape_cast %8 : vector<16xf32> to vector<16x1xf32>
    %cst_3 = arith.constant 2.560000e+02 : f32
    %10 = vector.broadcast %cst_3 : f32 to vector<16x1xf32>
    %11 = arith.divf %9, %10 : vector<16x1xf32>
    %cst_4 = arith.constant 9.99999974E-6 : f32
    %12 = vector.broadcast %cst_4 : f32 to vector<16x1xf32>
    %13 = arith.addf %11, %12 : vector<16x1xf32>
    %14 = math.rsqrt %13 : vector<16x1xf32>
    %c0_5 = arith.constant 0 : index
    %c0_6 = arith.constant 0 : index
    %15 = vector.load %arg2[%c0_5, %c0_6] : memref<1x256xf32, #tpu.memory_space<vmem>>, vector<1x256xf32>
    %c0_7 = arith.constant 0 : index
    %c0_8 = arith.constant 0 : index
    %16 = vector.load %arg3[%c0_7, %c0_8] : memref<1x256xf32, #tpu.memory_space<vmem>>, vector<1x256xf32>
    %17 = vector.broadcast %14 : vector<16x1xf32> to vector<16x256xf32>
    %18 = arith.mulf %6, %17 : vector<16x256xf32>
    %19 = vector.broadcast %15 : vector<1x256xf32> to vector<16x256xf32>
    %20 = arith.mulf %18, %19 : vector<16x256xf32>
    %21 = vector.broadcast %16 : vector<1x256xf32> to vector<16x256xf32>
    %22 = arith.addf %20, %21 : vector<16x256xf32>
    %c0_9 = arith.constant 0 : index
    %c0_10 = arith.constant 0 : index
    %23 = vector.load %arg4[%c0_9, %c0_10] : memref<16x256xf32, #tpu.memory_space<vmem>>, vector<16x256xf32>
    tpu.vector_store %arg4[%c0_9, %c0_10], %22 {strides = array<i32>} : memref<16x256xf32, #tpu.memory_space<vmem>>, vector<16x256xf32>,
    return
  }
  func.func @transform_0(%arg0: i32) -> (i32, i32) {
    %c0_i32 = arith.constant 0 : i32
    %c0_i32_0 = arith.constant 0 : i32
    return %arg0, %c0_i32 : i32, i32
  }
  func.func @transform_1(%arg0: i32) -> (i32, i32) {
    %c0_i32 = arith.constant 0 : i32
    %c0_i32_0 = arith.constant 0 : i32
    %c0_i32_1 = arith.constant 0 : i32
    return %c0_i32, %c0_i32_0 : i32, i32
  }
  func.func @transform_2(%arg0: i32) -> (i32, i32) {
    %c0_i32 = arith.constant 0 : i32
    %c0_i32_0 = arith.constant 0 : i32
    %c0_i32_1 = arith.constant 0 : i32
    return %c0_i32, %c0_i32_0 : i32, i32
  }
  func.func @transform_3(%arg0: i32) -> (i32, i32) {
    %c0_i32 = arith.constant 0 : i32
    %c0_i32_0 = arith.constant 0 : i32
    return %arg0, %c0_i32 : i32, i32
  }
}

</mosaic_0001>

<llo_original>
// kernel: tpu_custom_call.1
$region0: #{tpu_custom_call.1}
  #allocation0 [shape = 'u32[]', space=smem, size = 0x4, offset = 0x4, fixed_abs, tag = 'smem constant byte address 0x4 - core index']
  #allocation1 [shape = 'u32[144,128]{1,0:T(1,128)}', space=vmem, size = 0x12000, scoped, tag = 'internal scratch']
  %s0 = inlined_call_operand.hbm [shape: f32[16,256], index: 0, kind: input, shape index: {}]
  %s1 = inlined_call_operand.vmem [shape: f32[1,256], index: 1, kind: input, shape index: {}]
  %s2 = inlined_call_operand.vmem [shape: f32[1,256], index: 2, kind: input, shape index: {}]
  %s3 = inlined_call_operand.hbm [shape: f32[16,256], index: 3, kind: output, shape index: {}]
  %s4 = sld [smem:[#allocation0]]
  $region26: #{tpu_custom_call.1} parent=0
    _
  %s6 = ssub.s32 1, %s4
  %s7 = scalar_select 0, %s6, %s4
  $region1: #{tpu_custom_call.1} parent=0
    #allocation2 [shape = 'u8[16384]{0}', space=vmem, size = 0x4000, scoped, tag = 'input window, operand 0, single buffered']
    #allocation3 [shape = 's32[1]{0}', space=sflag, size = 0x4, scoped, tag = 'scoped memory for tpu_custom_call.1']
    #allocation4 [shape = 's32[1]{0}', space=sflag, size = 0x4, scoped, tag = 'scoped memory for tpu_custom_call.1']
    #allocation5 [shape = 'u8[16384]{0}', space=vmem, size = 0x4000, scoped, tag = 'output window, operand 0, single buffered']
    %8 = vsyncpa [#allocation3], 0
    %9 = vsyncpa [#allocation4], 0
    // Predicated region
    $region2: #{tpu_custom_call.1} parent=1 // pred_check
      _
    $region3: #{tpu_custom_call.1} parent=1 // pred_check_branch
      %11 = sbr.rel (0) target = $region5
    $region4: #{tpu_custom_call.1} parent=1 // pred_region
      %s13 = ssub.s32 512, 512
      %14 = vsyncadd [#allocation3], %s13
      %s15 = sshll.u32 [#allocation2], 4
      %s16 = int_to_ptr.vmem [resolvable:$true] %s15
      %21 = dma.hbm_to_vmem [thread:$0]  %s0, 512, %s16, [#allocation3], 256, 256, 16
    $region5: #{tpu_custom_call.1} parent=1 // pred_fallthru
      _
    // Predicated region
    $region6: #{tpu_custom_call.1} parent=1 // pred_check
      _
    $region7: #{tpu_custom_call.1} parent=1 // pred_check_branch
      %23 = sbr.rel (0) target = $region9
    $region8: #{tpu_custom_call.1} parent=1 // pred_region
      _
    $region9: #{tpu_custom_call.1} parent=1 // pred_fallthru
      _
    // Predicated region
    $region10: #{tpu_custom_call.1} parent=1 // pred_check
      _
    $region11: #{tpu_custom_call.1} parent=1 // pred_check_branch
      %25 = sbr.rel (0) target = $region13
    $region12: #{tpu_custom_call.1} parent=1 // pred_region
      _
    $region13: #{tpu_custom_call.1} parent=1 // pred_fallthru
      _
    // Predicated region
    $region14: #{tpu_custom_call.1} parent=1 // pred_check
      _
    $region15: #{tpu_custom_call.1} parent=1 // pred_check_branch
      %27 = sbr.rel (0) target = $region17
    $region16: #{tpu_custom_call.1} parent=1 // pred_region
      %28 = dma.done [#allocation3], 512
    $region17: #{tpu_custom_call.1} parent=1 // pred_fallthru
      _
    %v29 = vld [vmem:[#allocation2] sm:$0xff]
    %v30 = vld [vmem:[#allocation2 + $0x8] sm:$0xff]
    %v31 = vld [vmem:[#allocation2 + $0x10] sm:$0xff]
    %v32 = vld [vmem:[#allocation2 + $0x18] sm:$0xff]
    %v33 = vadd.f32 %v29, %v30
    %34 = vadd.xlane.f32.xlu0 %v33
    %v35 = vpop.xlane.xlu0 %34
    %v36 = vadd.f32 %v31, %v32
    %37 = vadd.xlane.f32.xlu0 %v36
    %v38 = vpop.xlane.xlu0 %37
    %v39 = vrcp.pop 256.0
    %v40 = vmul.f32 %v35, %v39
    %v41 = vmul.f32 %v38, %v39
    %v42 = vsub.f32 %v29, %v40
    %v43 = vsub.f32 %v30, %v40
    %v44 = vsub.f32 %v31, %v41
    %v45 = vsub.f32 %v32, %v41
    %v46 = vmul.f32 %v42, %v42
    %v47 = vmul.f32 %v43, %v43
    %v48 = vmul.f32 %v44, %v44
    %v49 = vmul.f32 %v45, %v45
    %v50 = vadd.f32 %v46, %v47
    %51 = vadd.xlane.f32.xlu0 %v50
    %v52 = vpop.xlane.xlu0 %51
    %v53 = vadd.f32 %v48, %v49
    %54 = vadd.xlane.f32.xlu0 %v53
    %v55 = vpop.xlane.xlu0 %54
    %v56 = vmul.f32 %v52, %v39
    %v57 = vmul.f32 %v55, %v39
    %v58 = vadd.f32 %v56, 1e-05
    %v59 = vadd.f32 %v57, 1e-05
    %v60 = vrsqrt.pop %v58
    %v61 = vrsqrt.pop %v59
    %v62 = vld [vmem:[%s1] sm:$0x3]
    %v63 = vld [vmem:[%s2] sm:$0x3]
    %v64 = vmul.f32 %v42, %v60
    %v65 = vmul.f32 %v43, %v60
    %v66 = vmul.f32 %v44, %v61
    %v67 = vmul.f32 %v45, %v61
    %v69 = vlaneseq
    %v70 = vshrl.u32 %v69, 7
    %v71 = vsub.s32 0, %v70
    %v72 = vrot.slane %v62, %v71
    %v73 = vlaneseq
    %v74 = vshrl.u32 %v73, 7
    %v75 = vsub.s32 1, %v74
    %v76 = vrot.slane %v62, %v75
    %v79 = vmul.f32 %v64, %v72
    %v80 = vmul.f32 %v65, %v76
    %v81 = vmul.f32 %v66, %v72
    %v82 = vmul.f32 %v67, %v76
    %v84 = vlaneseq
    %v85 = vshrl.u32 %v84, 7
    %v86 = vsub.s32 0, %v85
    %v87 = vrot.slane %v63, %v86
    %v88 = vlaneseq
    %v89 = vshrl.u32 %v88, 7
    %v90 = vsub.s32 1, %v89
    %v91 = vrot.slane %v63, %v90
    %v94 = vadd.f32 %v79, %v87
    %v95 = vadd.f32 %v80, %v91
    %v96 = vadd.f32 %v81, %v87
    %v97 = vadd.f32 %v82, %v91
    %98 = vst [vmem:[#allocation5] sm:$0xff] %v94
    %99 = vst [vmem:[#allocation5 + $0x8] sm:$0xff] %v95
    %100 = vst [vmem:[#allocation5 + $0x10] sm:$0xff] %v96
    %101 = vst [vmem:[#allocation5 + $0x18] sm:$0xff] %v97
    // Predicated region
    $region18: #{tpu_custom_call.1} parent=1 // pred_check
      _
    $region19: #{tpu_custom_call.1} parent=1 // pred_check_branch
      %103 = sbr.rel (0) target = $region21
    $region20: #{tpu_custom_call.1} parent=1 // pred_region
      %s105 = ssub.s32 512, 512
      %106 = vsyncadd [#allocation4], %s105
      %s107 = sshll.u32 [#allocation5], 4
      %s108 = int_to_ptr.vmem [resolvable:$true] %s107
      %113 = dma.vmem_to_hbm [thread:$0]  %s108, 512, %s3, [#allocation4], 256, 256, 16
    $region21: #{tpu_custom_call.1} parent=1 // pred_fallthru
      _
    // Predicated region
    $region22: #{tpu_custom_call.1} parent=1 // pred_check
      _
    $region23: #{tpu_custom_call.1} parent=1 // pred_check_branch
      %115 = sbr.rel (0) target = $region25
    $region24: #{tpu_custom_call.1} parent=1 // pred_region
      %116 = dma.done [#allocation4], 512
    $region25: #{tpu_custom_call.1} parent=1 // pred_fallthru
      _
    %117 = vsyncpa [#allocation3], 1
    %118 = vsyncpa [#allocation4], 1

</llo_original>
